<compile_context>
chip_gen: v7x
topology: tpu7x:2x2x1
jax: 0.10.0
libtpu: 0.0.40
codegen_flags: <defaults>
</compile_context>

<pallas_src>
import functools

import jax
import jax.numpy as jnp
from jax.experimental import pallas as pl
from jax.experimental.pallas import tpu as pltpu

EPS = 1e-20


def _round_up(x, m):
    return (x + m - 1) // m * m


def _stable_softmax(z):
    m = jnp.max(z, axis=-1, keepdims=True)
    e = jnp.exp(z - m)
    s = jnp.sum(e, axis=-1, keepdims=True)
    # One reciprocal per row instead of c_dim divides per row.
    return e * (1.0 / s)


def gumbel_softmax_kernel(x_ref, w_ref, b_ref, u_ref,
                          logits_ref, prob_ref, y_ref, *, inv_temperature):
    # logits = x @ W + b  (MXU matmul, f32 accumulation)
    logits = jnp.dot(x_ref[...], w_ref[...],
                     preferred_element_type=jnp.float32) + b_ref[...]

    # prob = softmax(logits, dim=-1)
    prob = _stable_softmax(logits)

    # Gumbel noise: g = -log(-log(U + eps) + eps), U ~ Uniform(0,1) streamed from HBM.
    g = -jnp.log(-jnp.log(u_ref[...] + EPS) + EPS)

    # y = softmax((logits + g) / temperature, dim=-1)
    y = _stable_softmax((logits + g) * inv_temperature)

    logits_ref[...] = logits.astype(logits_ref.dtype)
    prob_ref[...] = prob.astype(prob_ref.dtype)
    y_ref[...] = y.astype(y_ref.dtype)


def gumbel_softmax_forward(x, w, b, noise_key, temperature=1.0, tile_n=512):
    """x: (..., f_dim) -> (logits, prob, y), each (N, c_dim) with N = prod(leading dims)."""
    f_dim = x.shape[-1]
    c_dim = w.shape[1]
    x2d = x.reshape(-1, f_dim).astype(jnp.float32)       # glue: flatten leading dims
    n = x2d.shape[0]
    b2d = b.reshape(1, c_dim).astype(jnp.float32)
    w2d = w.astype(jnp.float32)

    # Row tile: multiple of 8 (sublane), large enough to pipeline against HBM, tiny VMEM footprint
    # (512 x (f_dim + 4*c_dim) x 4 B x 2 bufs << 1 MiB for the demo sizes).
    tn = min(int(tile_n), _round_up(n, 8))
    n_pad = _round_up(n, tn)
    if n_pad != n:
        x2d = jnp.pad(x2d, ((0, n_pad - n), (0, 0)))     # zero rows -> finite, sliced off below
    grid = (n_pad // tn,)

    # U ~ Uniform(0,1), same role as torch.rand(logits.size()) in the module.
    u = jax.random.uniform(noise_key, (n_pad, c_dim), dtype=jnp.float32,
                           minval=0.0, maxval=1.0)

    kernel = functools.partial(gumbel_softmax_kernel,
                               inv_temperature=1.0 / float(temperature))
    out_shape = (
        jax.ShapeDtypeStruct((n_pad, c_dim), jnp.float32),   # logits
        jax.ShapeDtypeStruct((n_pad, c_dim), jnp.float32),   # prob
        jax.ShapeDtypeStruct((n_pad, c_dim), jnp.float32),   # y (gumbel-softmax sample)
    )
    row_x_spec = pl.BlockSpec((tn, f_dim), lambda i: (i, 0))
    row_c_spec = pl.BlockSpec((tn, c_dim), lambda i: (i, 0))
    pinned_w = pl.BlockSpec((f_dim, c_dim), lambda i: (0, 0))   # resident across the grid
    pinned_b = pl.BlockSpec((1, c_dim), lambda i: (0, 0))

    logits, prob, y = pl.pallas_call(
        kernel,
        out_shape=out_shape,
        grid=grid,
        in_specs=[row_x_spec, pinned_w, pinned_b, row_c_spec],
        out_specs=(row_c_spec, row_c_spec, row_c_spec),
        compiler_params=pltpu.CompilerParams(
            dimension_semantics=("parallel",),   # independent row tiles -> megacore-shardable
        ),
    )(x2d, w2d, b2d, u)

    if n_pad != n:
        logits, prob, y = logits[:n], prob[:n], y[:n]
    return logits, prob, y


if __name__ == "__main__":
    f_dim, c_dim = 32, 16
    temperature = 1.0

    key = jax.random.PRNGKey(0)
    kx, kw, kb, kx2, kn1, kn2 = jax.random.split(key, 6)

    # Deterministic Linear(f_dim, c_dim) params, PyTorch-style uniform(-1/sqrt(f_dim), 1/sqrt(f_dim)).
    bound = 1.0 / (f_dim ** 0.5)
    w = jax.random.uniform(kw, (f_dim, c_dim), minval=-bound, maxval=bound, dtype=jnp.float32)
    b = jax.random.uniform(kb, (c_dim,), minval=-bound, maxval=bound, dtype=jnp.float32)

    def run_and_check(x, noise_key):
        logits, prob, y = gumbel_softmax_forward(x, w, b, noise_key, temperature=temperature)
        jax.block_until_ready((logits, prob, y))

        x2d = x.reshape(-1, f_dim)
        n = x2d.shape[0]
        assert logits.shape == (n, c_dim)
        assert prob.shape == (n, c_dim)
        assert y.shape == (n, c_dim)

        # logits / prob are deterministic -> reference check in plain JAX (HIGHEST-precision matmul
        # so the reference matches the kernel's f32 MXU accumulation).
        logits_ref = jnp.dot(x2d, w, precision=jax.lax.Precision.HIGHEST) + b
        prob_ref = jax.nn.softmax(logits_ref, axis=-1)
        assert jnp.allclose(logits, logits_ref, atol=1e-4, rtol=1e-4)
        assert jnp.allclose(prob, prob_ref, atol=1e-4, rtol=1e-4)
        assert jnp.allclose(jnp.sum(prob, axis=-1), 1.0, atol=1e-5)

        # y uses uniform noise drawn in the wrapper (same distribution as torch.rand, not bitwise):
        # verify it is a valid gumbel-softmax sample.
        assert bool(jnp.all(jnp.isfinite(y)))
        assert bool(jnp.all(y >= 0.0)) and bool(jnp.all(y <= 1.0))
        assert jnp.allclose(jnp.sum(y, axis=-1), 1.0, atol=1e-5)

    # Small shape consistent with the module: (batch=2, seq=8, f_dim) -> N = 16 rows, single tile.
    x_small = jax.random.normal(kx, (2, 8, f_dim), dtype=jnp.float32)
    run_and_check(x_small, noise_key=kn1)

    # Non-tile-multiple N (2*515 = 1030 rows) to exercise the multi-tile grid + padding path.
    x_med = jax.random.normal(kx2, (2, 515, f_dim), dtype=jnp.float32)
    run_and_check(x_med, noise_key=kn2)

    print("KERNEL_OK")
</pallas_src>

<mosaic_0001>
module attributes {stable_mosaic.version = 11 : i64} {
  func.func @gumbel_softmax_kernel(%arg0: i32, %arg1: memref<16x32xf32, #tpu.memory_space<vmem>>, %arg2: memref<32x16xf32, #tpu.memory_space<vmem>>, %arg3: memref<1x16xf32, #tpu.memory_space<vmem>>, %arg4: memref<16x16xf32, #tpu.memory_space<vmem>>, %arg5: memref<16x16xf32, #tpu.memory_space<vmem>>, %arg6: memref<16x16xf32, #tpu.memory_space<vmem>>, %arg7: memref<16x16xf32, #tpu.memory_space<vmem>>) attributes {dimension_semantics = [#tpu.dimension_semantics<parallel>], iteration_bounds = array<i64: 1>, scalar_prefetch = 0 : i64, scratch_operands = 0 : i64, tpu.core_type = #tpu.core_type<tc>, window_params = [{transform_indices = @transform_0, window_bounds = array<i64: 16, 32>}, {pipeline_mode = #tpu.pipeline_mode<synchronous>, transform_indices = @transform_1, window_bounds = array<i64: 32, 16>}, {pipeline_mode = #tpu.pipeline_mode<synchronous>, transform_indices = @transform_2, window_bounds = array<i64: 1, 16>}, {transform_indices = @transform_3, window_bounds = array<i64: 16, 16>}, {transform_indices = @transform_4, window_bounds = array<i64: 16, 16>}, {transform_indices = @transform_5, window_bounds = array<i64: 16, 16>}, {transform_indices = @transform_6, window_bounds = array<i64: 16, 16>}]} {
    %c0 = arith.constant 0 : index
    %c0_0 = arith.constant 0 : index
    %0 = vector.load %arg1[%c0, %c0_0] : memref<16x32xf32, #tpu.memory_space<vmem>>, vector<16x32xf32>
    %c0_1 = arith.constant 0 : index
    %c0_2 = arith.constant 0 : index
    %1 = vector.load %arg2[%c0_1, %c0_2] : memref<32x16xf32, #tpu.memory_space<vmem>>, vector<32x16xf32>
    %cst = arith.constant dense<0.000000e+00> : vector<16x16xf32>
    %2 = tpu.matmul %0, %1, %cst {dimension_numbers = #tpu.dot_dimension_numbers<[1], [0], [0], [1], [0, 0, 1, 1], [], []>} : vector<16x32xf32>, vector<32x16xf32>, vector<16x16xf32> -> vector<16x16xf32>
    %c0_3 = arith.constant 0 : index
    %c0_4 = arith.constant 0 : index
    %3 = vector.load %arg3[%c0_3, %c0_4] : memref<1x16xf32, #tpu.memory_space<vmem>>, vector<1x16xf32>
    %4 = vector.broadcast %3 : vector<1x16xf32> to vector<16x16xf32>
    %5 = arith.addf %2, %4 : vector<16x16xf32>
    %cst_5 = arith.constant dense<0xFF800000> : vector<16xf32>
    %6 = vector.multi_reduction <maximumf>, %5, %cst_5 [1] : vector<16x16xf32> to vector<16xf32>
    %7 = vector.shape_cast %6 : vector<16xf32> to vector<16x1xf32>
    %8 = vector.broadcast %7 : vector<16x1xf32> to vector<16x16xf32>
    %9 = arith.subf %5, %8 : vector<16x16xf32>
    %10 = math.exp %9 : vector<16x16xf32>
    %cst_6 = arith.constant dense<0.000000e+00> : vector<16xf32>
    %11 = vector.multi_reduction <add>, %10, %cst_6 [1] : vector<16x16xf32> to vector<16xf32>
    %12 = vector.shape_cast %11 : vector<16xf32> to vector<16x1xf32>
    %cst_7 = arith.constant 1.000000e+00 : f32
    %13 = vector.broadcast %cst_7 : f32 to vector<16x1xf32>
    %14 = arith.divf %13, %12 : vector<16x1xf32>
    %15 = vector.broadcast %14 : vector<16x1xf32> to vector<16x16xf32>
    %16 = arith.mulf %10, %15 : vector<16x16xf32>
    %c0_8 = arith.constant 0 : index
    %c0_9 = arith.constant 0 : index
    %17 = vector.load %arg4[%c0_8, %c0_9] : memref<16x16xf32, #tpu.memory_space<vmem>>, vector<16x16xf32>
    %cst_10 = arith.constant 9.99999968E-21 : f32
    %18 = vector.broadcast %cst_10 : f32 to vector<16x16xf32>
    %19 = arith.addf %17, %18 : vector<16x16xf32>
    %20 = math.log %19 : vector<16x16xf32>
    %cst_11 = arith.constant 0.000000e+00 : f32
    %21 = vector.broadcast %cst_11 : f32 to vector<16x16xf32>
    %22 = arith.subf %21, %20 : vector<16x16xf32>
    %cst_12 = arith.constant 9.99999968E-21 : f32
    %23 = vector.broadcast %cst_12 : f32 to vector<16x16xf32>
    %24 = arith.addf %22, %23 : vector<16x16xf32>
    %25 = math.log %24 : vector<16x16xf32>
    %cst_13 = arith.constant 0.000000e+00 : f32
    %26 = vector.broadcast %cst_13 : f32 to vector<16x16xf32>
    %27 = arith.subf %26, %25 : vector<16x16xf32>
    %28 = arith.addf %5, %27 : vector<16x16xf32>
    %cst_14 = arith.constant 1.000000e+00 : f32
    %29 = vector.broadcast %cst_14 : f32 to vector<16x16xf32>
    %30 = arith.mulf %28, %29 : vector<16x16xf32>
    %cst_15 = arith.constant dense<0xFF800000> : vector<16xf32>
    %31 = vector.multi_reduction <maximumf>, %30, %cst_15 [1] : vector<16x16xf32> to vector<16xf32>
    %32 = vector.shape_cast %31 : vector<16xf32> to vector<16x1xf32>
    %33 = vector.broadcast %32 : vector<16x1xf32> to vector<16x16xf32>
    %34 = arith.subf %30, %33 : vector<16x16xf32>
    %35 = math.exp %34 : vector<16x16xf32>
    %cst_16 = arith.constant dense<0.000000e+00> : vector<16xf32>
    %36 = vector.multi_reduction <add>, %35, %cst_16 [1] : vector<16x16xf32> to vector<16xf32>
    %37 = vector.shape_cast %36 : vector<16xf32> to vector<16x1xf32>
    %cst_17 = arith.constant 1.000000e+00 : f32
    %38 = vector.broadcast %cst_17 : f32 to vector<16x1xf32>
    %39 = arith.divf %38, %37 : vector<16x1xf32>
    %40 = vector.broadcast %39 : vector<16x1xf32> to vector<16x16xf32>
    %41 = arith.mulf %35, %40 : vector<16x16xf32>
    %c0_18 = arith.constant 0 : index
    %c0_19 = arith.constant 0 : index
    %42 = vector.load %arg5[%c0_18, %c0_19] : memref<16x16xf32, #tpu.memory_space<vmem>>, vector<16x16xf32>
    tpu.vector_store %arg5[%c0_18, %c0_19], %5 {strides = array<i32>} : memref<16x16xf32, #tpu.memory_space<vmem>>, vector<16x16xf32>,
    %c0_20 = arith.constant 0 : index
    %c0_21 = arith.constant 0 : index
    %43 = vector.load %arg6[%c0_20, %c0_21] : memref<16x16xf32, #tpu.memory_space<vmem>>, vector<16x16xf32>
    tpu.vector_store %arg6[%c0_20, %c0_21], %16 {strides = array<i32>} : memref<16x16xf32, #tpu.memory_space<vmem>>, vector<16x16xf32>,
    %c0_22 = arith.constant 0 : index
    %c0_23 = arith.constant 0 : index
    %44 = vector.load %arg7[%c0_22, %c0_23] : memref<16x16xf32, #tpu.memory_space<vmem>>, vector<16x16xf32>
    tpu.vector_store %arg7[%c0_22, %c0_23], %41 {strides = array<i32>} : memref<16x16xf32, #tpu.memory_space<vmem>>, vector<16x16xf32>,
    return
  }
  func.func @transform_0(%arg0: i32) -> (i32, i32) {
    %c0_i32 = arith.constant 0 : i32
    %c0_i32_0 = arith.constant 0 : i32
    return %arg0, %c0_i32 : i32, i32
  }
  func.func @transform_1(%arg0: i32) -> (i32, i32) {
    %c0_i32 = arith.constant 0 : i32
    %c0_i32_0 = arith.constant 0 : i32
    %c0_i32_1 = arith.constant 0 : i32
    return %c0_i32, %c0_i32_0 : i32, i32
  }
  func.func @transform_2(%arg0: i32) -> (i32, i32) {
    %c0_i32 = arith.constant 0 : i32
    %c0_i32_0 = arith.constant 0 : i32
    %c0_i32_1 = arith.constant 0 : i32
    return %c0_i32, %c0_i32_0 : i32, i32
  }
  func.func @transform_3(%arg0: i32) -> (i32, i32) {
    %c0_i32 = arith.constant 0 : i32
    %c0_i32_0 = arith.constant 0 : i32
    return %arg0, %c0_i32 : i32, i32
  }
  func.func @transform_4(%arg0: i32) -> (i32, i32) {
    %c0_i32 = arith.constant 0 : i32
    %c0_i32_0 = arith.constant 0 : i32
    return %arg0, %c0_i32 : i32, i32
  }
  func.func @transform_5(%arg0: i32) -> (i32, i32) {
    %c0_i32 = arith.constant 0 : i32
    %c0_i32_0 = arith.constant 0 : i32
    return %arg0, %c0_i32 : i32, i32
  }
  func.func @transform_6(%arg0: i32) -> (i32, i32) {
    %c0_i32 = arith.constant 0 : i32
    %c0_i32_0 = arith.constant 0 : i32
    return %arg0, %c0_i32 : i32, i32
  }
}

</mosaic_0001>

<llo_original>
// kernel: tpu_custom_call.1
$region0: #{tpu_custom_call.1}
  #allocation0 [shape = 'u32[]', space=smem, size = 0x4, offset = 0x4, fixed_abs, tag = 'smem constant byte address 0x4 - core index']
  #allocation1 [shape = 'u32[144,128]{1,0:T(1,128)}', space=vmem, size = 0x12000, scoped, tag = 'internal scratch']
  %s0 = inlined_call_operand.vmem [shape: f32[16,32], index: 0, kind: input, shape index: {}]
  %s1 = inlined_call_operand.vmem [shape: f32[32,16], index: 1, kind: input, shape index: {}]
  %s2 = inlined_call_operand.vmem [shape: f32[1,16], index: 2, kind: input, shape index: {}]
  %s3 = inlined_call_operand.vmem [shape: f32[16,16], index: 3, kind: input, shape index: {}]
  %s4 = inlined_call_operand.hbm [shape: f32[16,16], index: 4, kind: output, shape index: {0}]
  %s5 = inlined_call_operand.hbm [shape: f32[16,16], index: 5, kind: output, shape index: {1}]
  %s6 = inlined_call_operand.hbm [shape: f32[16,16], index: 6, kind: output, shape index: {2}]
  %7 = xla_tuple %s4, %s5, %s6
  %s8 = sld [smem:[#allocation0]]
  $region42: #{tpu_custom_call.1} parent=0
    _
  %s10 = ssub.s32 1, %s8
  %s11 = scalar_select 0, %s10, %s8
  $region1: #{tpu_custom_call.1} parent=0
    #allocation2 [shape = 'u8[8192]{0}', space=vmem, size = 0x2000, scoped, tag = 'output window, operand 0, single buffered']
    #allocation3 [shape = 's32[1]{0}', space=sflag, size = 0x4, scoped, tag = 'scoped memory for tpu_custom_call.1']
    #allocation4 [shape = 'u8[8192]{0}', space=vmem, size = 0x2000, scoped, tag = 'output window, operand 1, single buffered']
    #allocation5 [shape = 's32[1]{0}', space=sflag, size = 0x4, scoped, tag = 'scoped memory for tpu_custom_call.1']
    #allocation6 [shape = 'u8[8192]{0}', space=vmem, size = 0x2000, scoped, tag = 'output window, operand 2, single buffered']
    %12 = vsyncpa [#allocation3], 0
    %13 = vsyncpa [#allocation5], 0
    // Predicated region
    $region2: #{tpu_custom_call.1} parent=1 // pred_check
      _
    $region3: #{tpu_custom_call.1} parent=1 // pred_check_branch
      %15 = sbr.rel (0) target = $region5
    $region4: #{tpu_custom_call.1} parent=1 // pred_region
      _
    $region5: #{tpu_custom_call.1} parent=1 // pred_fallthru
      _
    // Predicated region
    $region6: #{tpu_custom_call.1} parent=1 // pred_check
      _
    $region7: #{tpu_custom_call.1} parent=1 // pred_check_branch
      %17 = sbr.rel (0) target = $region9
    $region8: #{tpu_custom_call.1} parent=1 // pred_region
      _
    $region9: #{tpu_custom_call.1} parent=1 // pred_fallthru
      _
    // Predicated region
    $region10: #{tpu_custom_call.1} parent=1 // pred_check
      _
    $region11: #{tpu_custom_call.1} parent=1 // pred_check_branch
      %19 = sbr.rel (0) target = $region13
    $region12: #{tpu_custom_call.1} parent=1 // pred_region
      _
    $region13: #{tpu_custom_call.1} parent=1 // pred_fallthru
      _
    // Predicated region
    $region14: #{tpu_custom_call.1} parent=1 // pred_check
      _
    $region15: #{tpu_custom_call.1} parent=1 // pred_check_branch
      %21 = sbr.rel (0) target = $region17
    $region16: #{tpu_custom_call.1} parent=1 // pred_region
      _
    $region17: #{tpu_custom_call.1} parent=1 // pred_fallthru
      _
    %v22 = vld [vmem:[%s0] sm:$0xff]
    %v23 = vld [vmem:[%s0 + $0x8] sm:$0xff]
    %v24 = vld [vmem:[%s1] sm:$0xff]
    %v25 = vld [vmem:[%s1 + $0x8] sm:$0xff]
    %v26 = vld [vmem:[%s1 + $0x10] sm:$0xff]
    %v27 = vld [vmem:[%s1 + $0x18] sm:$0xff]
    %v28 = vld [vmem:[%s2] sm:$0x1]
    %v30 = vlaneseq
    %v31 = vshrl.u32 %v30, 7
    %v32 = vsub.s32 0, %v31
    %v33 = vrot.slane %v28, %v32
    %vm35 = vcmask 261120
    %v37 = vsel %vm35, %v22, 0
    %v40 = vsel %vm35, %v23, 0
    %42 = vmatprep.subr.mxu0 0.0
    %43 = vmatpush1.msra.mxu0 %v24
    %44 = vmatprep.subr.mxu0 0.0
    %45 = vmatpush1.msra.mxu0 %v25
    %46 = vmatprep.subr.mxu0 0.0
    %47 = vmatpush1.msra.mxu0 %v26
    %48 = vmatprep.subr.mxu0 0.0
    %49 = vmatpush1.msra.mxu0 %v27
    %50 = vmatprep.subr.mxu0 0.0
    %51 = vmatpush1.msra.mxu0 0.0
    %52 = vmatprep.subr.mxu0 0.0
    %53 = vmatpush1.msra.mxu0 0.0
    %54 = vmatprep.subr.mxu0 0.0
    %55 = vmatpush1.msra.mxu0 0.0
    %56 = vmatprep.subr.mxu0 0.0
    %57 = vmatpush1.msra.mxu0 0.0
    %58 = vmatprep.subr.mxu0 0.0
    %59 = vmatpush1.msra.mxu0 0.0
    %60 = vmatprep.subr.mxu0 0.0
    %61 = vmatpush1.msra.mxu0 0.0
    %62 = vmatprep.subr.mxu0 0.0
    %63 = vmatpush1.msra.mxu0 0.0
    %64 = vmatprep.subr.mxu0 0.0
    %65 = vmatpush1.msra.mxu0 0.0
    %66 = vmatprep.subr.mxu0 0.0
    %67 = vmatpush1.msra.mxu0 0.0
    %68 = vmatprep.subr.mxu0 0.0
    %69 = vmatpush1.msra.mxu0 0.0
    %70 = vmatprep.subr.mxu0 0.0
    %71 = vmatpush1.msra.mxu0 0.0
    %72 = vmatprep.subr.mxu0 0.0
    %73 = vmatpush1.msra.mxu0 0.0
    %74 = vmatprep.subr.mxu0 0.0
    %75 = vmatpush1.msra.mxu0 0.0
    %76 = vmatprep.subr.mxu0 0.0
    %77 = vmatpush1.msra.mxu0 0.0
    %78 = vmatprep.subr.mxu0 0.0
    %79 = vmatpush1.msra.mxu0 0.0
    %80 = vmatprep.subr.mxu0 0.0
    %81 = vmatpush1.msra.mxu0 0.0
    %82 = vmatprep.subr.mxu0 0.0
    %83 = vmatpush1.msra.mxu0 0.0
    %84 = vmatprep.subr.mxu0 0.0
    %85 = vmatpush1.msra.mxu0 0.0
    %86 = vmatprep.subr.mxu0 0.0
    %87 = vmatpush1.msra.mxu0 0.0
    %88 = vmatprep.subr.mxu0 0.0
    %89 = vmatpush1.msra.mxu0 0.0
    %90 = vmatprep.subr.mxu0 0.0
    %91 = vmatpush1.msra.mxu0 0.0
    %92 = vmatprep.subr.mxu0 0.0
    %93 = vmatpush1.msra.mxu0 0.0
    %94 = vmatprep.subr.mxu0 0.0
    %95 = vmatpush1.msra.mxu0 0.0
    %96 = vmatprep.subr.mxu0 0.0
    %97 = vmatpush1.msra.mxu0 0.0
    %98 = vmatprep.subr.mxu0 0.0
    %99 = vmatpush1.msra.mxu0 0.0
    %100 = vmatprep.subr.mxu0 0.0
    %101 = vmatpush1.msra.mxu0 0.0
    %102 = vmatprep.subr.mxu0 0.0
    %103 = vmatpush1.msra.mxu0 0.0
    %104 = vmatprep.subr.mxu0 0.0
    %105 = vmatpush1.msra.mxu0 0.0
    %106 = vmatprep.mubr.f32.mxu0 0.0
    %107 = vmatmul.mubr.f32.gmra.mrb[0].mxu0 %v37
    %v108 = vpop.f32.mrb[0].mxu0
    %v109 = vadd.f32 %v33, %v108
    %v110 = vpop.f32.mrb[0].mxu0
    %111 = vmatprep.mubr.f32.mxu0 0.0
    %112 = vmatmul.mubr.f32.gmra.mrb[0].mxu0 %v40
    %v113 = vpop.f32.mrb[0].mxu0
    %v114 = vadd.f32 %v33, %v113
    %v115 = vpop.f32.mrb[0].mxu0
    %116 = vdwg.mxu0
    %vm117 = vcmask 130048
    %v118 = vsel %vm117, %v109, -inf
    %119 = vmax.xlane.f32.xlu0 %v118
    %v120 = vpop.xlane.xlu0 %119
    %v121 = vsel %vm117, %v114, -inf
    %122 = vmax.xlane.f32.xlu0 %v121
    %v123 = vpop.xlane.xlu0 %122
    %v124 = vsub.f32 %v109, %v120
    %v125 = vsub.f32 %v114, %v123
    %v126 = vmul.f32 %v124, 1.442695
    %v127 = vpow.pop %v126
    %v128 = vmul.f32 %v125, 1.442695
    %v129 = vpow.pop %v128
    %v130 = vsel %vm117, %v127, 0.0
    %131 = vadd.xlane.f32.xlu0 %v130
    %v132 = vpop.xlane.xlu0 %131
    %v133 = vsel %vm117, %v129, 0.0
    %134 = vadd.xlane.f32.xlu0 %v133
    %v135 = vpop.xlane.xlu0 %134
    %v136 = vrcp.pop %v132
    %v137 = vmul.f32 1.0, %v136
    %v138 = vrcp.pop %v135
    %v139 = vmul.f32 1.0, %v138
    %v140 = vmul.f32 %v127, %v137
    %v141 = vmul.f32 %v129, %v139
    %v142 = vld [vmem:[%s3] sm:$0xff]
    %v143 = vld [vmem:[%s3 + $0x8] sm:$0xff]
    %v144 = vadd.f32 %v142, 1e-20
    %v145 = vadd.f32 %v143, 1e-20
    %v146 = vlog2.pop %v144
    %v147 = vmul.f32 %v146, 0.6931472
    %v148 = vlog2.pop %v145
    %v149 = vmul.f32 %v148, 0.6931472
    %v150 = vsub.f32 0.0, %v147
    %v151 = vsub.f32 0.0, %v149
    %v152 = vadd.f32 %v150, 1e-20
    %v153 = vadd.f32 %v151, 1e-20
    %v154 = vlog2.pop %v152
    %v155 = vmul.f32 %v154, 0.6931472
    %v156 = vlog2.pop %v153
    %v157 = vmul.f32 %v156, 0.6931472
    %v158 = vsub.f32 0.0, %v155
    %v159 = vsub.f32 0.0, %v157
    %v160 = vadd.f32 %v109, %v158
    %v161 = vadd.f32 %v114, %v159
    %v162 = vsel %vm117, %v160, -inf
    %163 = vmax.xlane.f32.xlu0 %v162
    %v164 = vpop.xlane.xlu0 %163
    %v165 = vsel %vm117, %v161, -inf
    %166 = vmax.xlane.f32.xlu0 %v165
    %v167 = vpop.xlane.xlu0 %166
    %v168 = vsub.f32 %v160, %v164
    %v169 = vsub.f32 %v161, %v167
    %v170 = vmul.f32 %v168, 1.442695
    %v171 = vpow.pop %v170
    %v172 = vmul.f32 %v169, 1.442695
    %v173 = vpow.pop %v172
    %v174 = vsel %vm117, %v171, 0.0
    %175 = vadd.xlane.f32.xlu0 %v174
    %v176 = vpop.xlane.xlu0 %175
    %v177 = vsel %vm117, %v173, 0.0
    %178 = vadd.xlane.f32.xlu0 %v177
    %v179 = vpop.xlane.xlu0 %178
    %v180 = vrcp.pop %v176
    %v181 = vmul.f32 1.0, %v180
    %v182 = vrcp.pop %v179
    %v183 = vmul.f32 1.0, %v182
    %v184 = vmul.f32 %v171, %v181
    %v185 = vmul.f32 %v173, %v183
    %186 = vst.msk [vmem:[#allocation2] sm:$0xff] %vm117, %v109
    %187 = vst.msk [vmem:[#allocation2 + $0x8] sm:$0xff] %vm117, %v114
    %188 = vst.msk [vmem:[#allocation4] sm:$0xff] %vm117, %v140
    %189 = vst.msk [vmem:[#allocation4 + $0x8] sm:$0xff] %vm117, %v141
    %190 = vst.msk [vmem:[#allocation6] sm:$0xff] %vm117, %v184
    %191 = vst.msk [vmem:[#allocation6 + $0x8] sm:$0xff] %vm117, %v185
    // Predicated region
    $region18: #{tpu_custom_call.1} parent=1 // pred_check
      _
    $region19: #{tpu_custom_call.1} parent=1 // pred_check_branch
      %193 = sbr.rel (0) target = $region21
    $region20: #{tpu_custom_call.1} parent=1 // pred_region
      %s195 = ssub.s32 256, 256
      %196 = vsyncadd [#allocation3], %s195
      %s197 = sshll.u32 [#allocation2], 4
      %s198 = int_to_ptr.vmem [resolvable:$true] %s197
      %203 = dma.vmem_to_hbm [thread:$0]  %s198, 256, %s4, [#allocation3], 128, 128, 8
    $region21: #{tpu_custom_call.1} parent=1 // pred_fallthru
      _
    // Predicated region
    $region22: #{tpu_custom_call.1} parent=1 // pred_check
      _
    $region23: #{tpu_custom_call.1} parent=1 // pred_check_branch
      %205 = sbr.rel (0) target = $region25
    $region24: #{tpu_custom_call.1} parent=1 // pred_region
      %s207 = ssub.s32 256, 256
      %208 = vsyncadd [#allocation5], %s207
      %s209 = sshll.u32 [#allocation4], 4
      %s210 = int_to_ptr.vmem [resolvable:$true] %s209
      %215 = dma.vmem_to_hbm [thread:$0]  %s210, 256, %s5, [#allocation5], 128, 128, 8
    $region25: #{tpu_custom_call.1} parent=1 // pred_fallthru
      _
    // Predicated region
    $region26: #{tpu_custom_call.1} parent=1 // pred_check
      _
    $region27: #{tpu_custom_call.1} parent=1 // pred_check_branch
      %217 = sbr.rel (0) target = $region29
    $region28: #{tpu_custom_call.1} parent=1 // pred_region
      %s219 = ssub.s32 256, 256
      %220 = vsyncadd [#allocation5], %s219
      %s221 = sshll.u32 [#allocation6], 4
      %s222 = int_to_ptr.vmem [resolvable:$true] %s221
      %227 = dma.vmem_to_hbm [thread:$0]  %s222, 256, %s6, [#allocation5], 128, 128, 8
    $region29: #{tpu_custom_call.1} parent=1 // pred_fallthru
      _
    // Predicated region
    $region30: #{tpu_custom_call.1} parent=1 // pred_check
      _
    $region31: #{tpu_custom_call.1} parent=1 // pred_check_branch
      %229 = sbr.rel (0) target = $region33
    $region32: #{tpu_custom_call.1} parent=1 // pred_region
      %230 = dma.done [#allocation3], 256
    $region33: #{tpu_custom_call.1} parent=1 // pred_fallthru
      _
    // Predicated region
    $region34: #{tpu_custom_call.1} parent=1 // pred_check
      _
    $region35: #{tpu_custom_call.1} parent=1 // pred_check_branch
      %232 = sbr.rel (0) target = $region37
    $region36: #{tpu_custom_call.1} parent=1 // pred_region
      %233 = dma.done [#allocation5], 256
    $region37: #{tpu_custom_call.1} parent=1 // pred_fallthru
      _
    // Predicated region
    $region38: #{tpu_custom_call.1} parent=1 // pred_check
      _
    $region39: #{tpu_custom_call.1} parent=1 // pred_check_branch
      %235 = sbr.rel (0) target = $region41
    $region40: #{tpu_custom_call.1} parent=1 // pred_region
      %236 = dma.done [#allocation5], 256
    $region41: #{tpu_custom_call.1} parent=1 // pred_fallthru
      _
    %237 = vsyncpa [#allocation3], 1
    %238 = vsyncpa [#allocation5], 1

</llo_original>
